<compile_context>
chip_gen: v7x
topology: tpu7x:2x2x1
jax: 0.10.0
libtpu: 0.0.40
codegen_flags: <defaults>
</compile_context>

<pallas_src>
import jax
import jax.numpy as jnp
from jax.experimental import pallas as pl
from jax.experimental.pallas import tpu as pltpu


def _round_up(x, m):
    return ((x + m - 1) // m) * m


def _pick_tn(out_pad):
    """Output-column tile: lane-dense (multiple of 128) divisor of out_pad."""
    if out_pad <= 512:
        return out_pad
    for tn in (512, 384, 256, 128):
        if out_pad % tn == 0:
            return tn
    return 128


def _vmem_capacity_bytes():
    """Per-generation VMEM capacity (v5e/v6e: 128 MiB, v7x: 64 MiB)."""
    try:
        info = pltpu.get_tpu_info()
        cap = getattr(info, "vmem_capacity_bytes", None)
        if cap:
            return int(cap)
    except Exception:
        pass
    return 64 << 20  # conservative default (v7x)


def _resident_spec(shape, index_map):
    """Single-buffered spec for operands that are constant across the inner
    (batch) grid axis; falls back to the default double-buffered spec if this
    JAX build's BlockSpec has no pipeline_mode kwarg."""
    try:
        return pl.BlockSpec(shape, index_map, pipeline_mode=pl.Buffered(1))
    except TypeError:
        return pl.BlockSpec(shape, index_map)


def _divunit_kernel(theta_ref, x_ref, w1_ref, w2_ref, b1_ref, b2_ref,
                    res_ref, y2_ref):
    theta = theta_ref[0, 0]
    x = x_ref[...]
    # Two lane-dense MXU matmuls (one per output half), f32 accumulation.
    y1 = jnp.dot(x, w1_ref[...], preferred_element_type=jnp.float32) + b1_ref[...]
    y2 = jnp.dot(x, w2_ref[...], preferred_element_type=jnp.float32) + b2_ref[...]
    # PyTorch semantics: unconditional divide, then 0/1 mask multiply
    # (preserves 0 * inf = NaN when y2 == 0 and y2 <= theta).
    # reciprocal runs on the EUP slot instead of a multi-op VALU divide.
    mask = (y2 > theta).astype(jnp.float32)
    res_ref[...] = mask * (y1 * pl.reciprocal(y2, approx=False))
    y2_ref[...] = y2


def prepare_divunit_params(weight, bias, out_features):
    """One-time parameter prep (hoisted out of the forward path).

    weight: [2*out, in_features]  (nn.Linear layout)
    bias:   [2*out]
    Returns lane-padded, MXU-friendly (w1, w2, b1, b2):
      w1, w2: [in_features, out_pad]   b1, b2: [1, out_pad]
    """
    two_out, in_f = weight.shape
    assert two_out == 2 * out_features
    out_pad = _round_up(out_features, 128)
    pad = out_pad - out_features
    wt = weight.T                                           # [in, 2*out]
    w1 = jnp.pad(wt[:, :out_features], ((0, 0), (0, pad)))
    w2 = jnp.pad(wt[:, out_features:], ((0, 0), (0, pad)))
    b1 = jnp.pad(bias[:out_features], (0, pad)).reshape(1, out_pad)
    # padded y2 lanes get bias 1.0 so they stay finite (0/1, not 0/0 = NaN)
    b2 = jnp.pad(bias[out_features:], (0, pad),
                 constant_values=1.0).reshape(1, out_pad)
    return w1, w2, b1, b2


def div_unit(x, params, out_features, theta=0.5):
    """DivUnit forward.

    x:      [B, in_features] float32
    params: output of prepare_divunit_params (prepped once, reused every call)
    returns (res [B, out], y2 [B, out])
    """
    w1, w2, b1, b2 = params
    B, in_f = x.shape
    out_pad = w1.shape[1]
    TN = _pick_tn(out_pad)
    n_col = out_pad // TN

    # --- batch tile sized from the per-generation VMEM budget ---
    vmem_cap = _vmem_capacity_bytes()
    budget = int(0.45 * vmem_cap)
    fixed = 4 * (2 * in_f * TN + 2 * TN)          # W1+W2 + biases, single-buffered
    per_row = 4 * (2 * in_f + 4 * TN)             # x (x2 bufs) + res,y2 (x2 bufs each)
    if budget > fixed + 8 * per_row:
        tb_cap = ((budget - fixed) // per_row) // 8 * 8
    else:
        tb_cap = 8
    TB = int(min(1024, max(8, tb_cap), _round_up(B, 8)))

    grid = (n_col, pl.cdiv(B, TB))  # column axis OUTER: weight tile reused across batch tiles

    needed = fixed + TB * per_row
    vmem_limit = int(min(vmem_cap, max(2 * needed, 16 << 20)))

    theta_arr = jnp.asarray(theta, dtype=jnp.float32).reshape(1, 1)

    res_p, y2_p = pl.pallas_call(
        _divunit_kernel,
        grid=grid,
        in_specs=[
            pl.BlockSpec(memory_space=pltpu.MemorySpace.SMEM),       # theta
            pl.BlockSpec((TB, in_f), lambda n, i: (i, 0)),           # x batch tile
            _resident_spec((in_f, TN), lambda n, i: (0, n)),         # W1 column tile
            _resident_spec((in_f, TN), lambda n, i: (0, n)),         # W2 column tile
            _resident_spec((1, TN), lambda n, i: (0, n)),            # b1
            _resident_spec((1, TN), lambda n, i: (0, n)),            # b2
        ],
        out_specs=(
            pl.BlockSpec((TB, TN), lambda n, i: (i, n)),             # res
            pl.BlockSpec((TB, TN), lambda n, i: (i, n)),             # y2
        ),
        out_shape=(
            jax.ShapeDtypeStruct((B, out_pad), jnp.float32),
            jax.ShapeDtypeStruct((B, out_pad), jnp.float32),
        ),
        compiler_params=pltpu.CompilerParams(
            dimension_semantics=("parallel", "parallel"),
            vmem_limit_bytes=vmem_limit),
    )(theta_arr, x, w1, w2, b1, b2)

    # Strip lane padding before returning (no-op when out is a 128-multiple).
    return res_p[:, :out_features], y2_p[:, :out_features]


def init_divunit_params(key, in_features, out_features):
    """Deterministic init matching nn.Linear's U(-1/sqrt(in), 1/sqrt(in))."""
    k_w, k_b = jax.random.split(key)
    bound = 1.0 / jnp.sqrt(jnp.float32(in_features))
    weight = jax.random.uniform(k_w, (2 * out_features, in_features),
                                jnp.float32, -bound, bound)
    bias = jax.random.uniform(k_b, (2 * out_features,),
                              jnp.float32, -bound, bound)
    return weight, bias


if __name__ == "__main__":
    batch = 8
    in_features = 32
    out_features = 16
    theta = 0.5

    key = jax.random.PRNGKey(0)
    k_x, k_p = jax.random.split(key)
    x = jax.random.normal(k_x, (batch, in_features), jnp.float32)
    weight, bias = init_divunit_params(k_p, in_features, out_features)

    # One-time parameter prep (done at init/load time, NOT per forward call).
    params = prepare_divunit_params(weight, bias, out_features)

    res, y2 = div_unit(x, params, out_features, theta=theta)
    jax.block_until_ready((res, y2))

    # Pure-JAX reference of the forward semantics.
    y_ref = x @ weight.T + bias
    y1_ref, y2_ref = y_ref[:, :out_features], y_ref[:, out_features:]
    res_ref = (y2_ref > theta).astype(jnp.float32) * (y1_ref / y2_ref)
    assert res.shape == (batch, out_features) and y2.shape == (batch, out_features)
    assert jnp.allclose(y2, y2_ref, atol=1e-5, rtol=1e-5)
    assert jnp.allclose(res, res_ref, atol=1e-5, rtol=1e-5, equal_nan=True)

    print("KERNEL_OK")
</pallas_src>

<mosaic_0001>
module attributes {stable_mosaic.version = 11 : i64} {
  func.func @_divunit_kernel(%arg0: i32, %arg1: i32, %arg2: memref<1x1xf32, #tpu.memory_space<smem>>, %arg3: memref<8x32xf32, #tpu.memory_space<vmem>>, %arg4: memref<32x128xf32, #tpu.memory_space<vmem>>, %arg5: memref<32x128xf32, #tpu.memory_space<vmem>>, %arg6: memref<1x128xf32, #tpu.memory_space<vmem>>, %arg7: memref<1x128xf32, #tpu.memory_space<vmem>>, %arg8: memref<8x128xf32, #tpu.memory_space<vmem>>, %arg9: memref<8x128xf32, #tpu.memory_space<vmem>>) attributes {dimension_semantics = [#tpu.dimension_semantics<parallel>, #tpu.dimension_semantics<parallel>], iteration_bounds = array<i64: 1, 1>, scalar_prefetch = 0 : i64, scratch_operands = 0 : i64, tpu.core_type = #tpu.core_type<tc>, window_params = [{transform_indices = @transform_0, window_bounds = array<i64: 1, 1>}, {transform_indices = @transform_1, window_bounds = array<i64: 8, 32>}, {pipeline_mode = #tpu.pipeline_mode<synchronous>, transform_indices = @transform_2, window_bounds = array<i64: 32, 128>}, {pipeline_mode = #tpu.pipeline_mode<synchronous>, transform_indices = @transform_3, window_bounds = array<i64: 32, 128>}, {pipeline_mode = #tpu.pipeline_mode<synchronous>, transform_indices = @transform_4, window_bounds = array<i64: 1, 128>}, {pipeline_mode = #tpu.pipeline_mode<synchronous>, transform_indices = @transform_5, window_bounds = array<i64: 1, 128>}, {transform_indices = @transform_6, window_bounds = array<i64: 8, 128>}, {transform_indices = @transform_7, window_bounds = array<i64: 8, 128>}]} {
    %c0 = arith.constant 0 : index
    %c0_0 = arith.constant 0 : index
    %0 = memref.load %arg2[%c0, %c0_0] : memref<1x1xf32, #tpu.memory_space<smem>>
    %c0_1 = arith.constant 0 : index
    %c0_2 = arith.constant 0 : index
    %1 = vector.load %arg3[%c0_1, %c0_2] : memref<8x32xf32, #tpu.memory_space<vmem>>, vector<8x32xf32>
    %c0_3 = arith.constant 0 : index
    %c0_4 = arith.constant 0 : index
    %2 = vector.load %arg4[%c0_3, %c0_4] : memref<32x128xf32, #tpu.memory_space<vmem>>, vector<32x128xf32>
    %cst = arith.constant dense<0.000000e+00> : vector<8x128xf32>
    %3 = tpu.matmul %1, %2, %cst {dimension_numbers = #tpu.dot_dimension_numbers<[1], [0], [0], [1], [0, 0, 1, 1], [], []>} : vector<8x32xf32>, vector<32x128xf32>, vector<8x128xf32> -> vector<8x128xf32>
    %c0_5 = arith.constant 0 : index
    %c0_6 = arith.constant 0 : index
    %4 = vector.load %arg6[%c0_5, %c0_6] : memref<1x128xf32, #tpu.memory_space<vmem>>, vector<1x128xf32>
    %5 = vector.broadcast %4 : vector<1x128xf32> to vector<8x128xf32>
    %6 = arith.addf %3, %5 : vector<8x128xf32>
    %c0_7 = arith.constant 0 : index
    %c0_8 = arith.constant 0 : index
    %7 = vector.load %arg5[%c0_7, %c0_8] : memref<32x128xf32, #tpu.memory_space<vmem>>, vector<32x128xf32>
    %cst_9 = arith.constant dense<0.000000e+00> : vector<8x128xf32>
    %8 = tpu.matmul %1, %7, %cst_9 {dimension_numbers = #tpu.dot_dimension_numbers<[1], [0], [0], [1], [0, 0, 1, 1], [], []>} : vector<8x32xf32>, vector<32x128xf32>, vector<8x128xf32> -> vector<8x128xf32>
    %c0_10 = arith.constant 0 : index
    %c0_11 = arith.constant 0 : index
    %9 = vector.load %arg7[%c0_10, %c0_11] : memref<1x128xf32, #tpu.memory_space<vmem>>, vector<1x128xf32>
    %10 = vector.broadcast %9 : vector<1x128xf32> to vector<8x128xf32>
    %11 = arith.addf %8, %10 : vector<8x128xf32>
    %12 = vector.broadcast %0 : f32 to vector<8x128xf32>
    %13 = arith.cmpf ogt, %11, %12 : vector<8x128xf32>
    %14 = arith.extui %13 : vector<8x128xi1> to vector<8x128xi32>
    %15 = arith.sitofp %14 : vector<8x128xi32> to vector<8x128xf32>
    %16 = tpu.reciprocal %11 : vector<8x128xf32> -> vector<8x128xf32>
    %17 = arith.mulf %6, %16 : vector<8x128xf32>
    %18 = arith.mulf %15, %17 : vector<8x128xf32>
    %c0_12 = arith.constant 0 : index
    %c0_13 = arith.constant 0 : index
    %19 = vector.load %arg8[%c0_12, %c0_13] : memref<8x128xf32, #tpu.memory_space<vmem>>, vector<8x128xf32>
    tpu.vector_store %arg8[%c0_12, %c0_13], %18 {strides = array<i32>} : memref<8x128xf32, #tpu.memory_space<vmem>>, vector<8x128xf32>,
    %c0_14 = arith.constant 0 : index
    %c0_15 = arith.constant 0 : index
    %20 = vector.load %arg9[%c0_14, %c0_15] : memref<8x128xf32, #tpu.memory_space<vmem>>, vector<8x128xf32>
    tpu.vector_store %arg9[%c0_14, %c0_15], %11 {strides = array<i32>} : memref<8x128xf32, #tpu.memory_space<vmem>>, vector<8x128xf32>,
    return
  }
  func.func @transform_0(%arg0: i32, %arg1: i32) -> (i32, i32) {
    %c0_i32 = arith.constant 0 : i32
    %c0_i32_0 = arith.constant 0 : i32
    %c0_i32_1 = arith.constant 0 : i32
    return %c0_i32, %c0_i32_0 : i32, i32
  }
  func.func @transform_1(%arg0: i32, %arg1: i32) -> (i32, i32) {
    %c0_i32 = arith.constant 0 : i32
    %c0_i32_0 = arith.constant 0 : i32
    return %arg1, %c0_i32 : i32, i32
  }
  func.func @transform_2(%arg0: i32, %arg1: i32) -> (i32, i32) {
    %c0_i32 = arith.constant 0 : i32
    %c0_i32_0 = arith.constant 0 : i32
    return %c0_i32, %arg0 : i32, i32
  }
  func.func @transform_3(%arg0: i32, %arg1: i32) -> (i32, i32) {
    %c0_i32 = arith.constant 0 : i32
    %c0_i32_0 = arith.constant 0 : i32
    return %c0_i32, %arg0 : i32, i32
  }
  func.func @transform_4(%arg0: i32, %arg1: i32) -> (i32, i32) {
    %c0_i32 = arith.constant 0 : i32
    %c0_i32_0 = arith.constant 0 : i32
    return %c0_i32, %arg0 : i32, i32
  }
  func.func @transform_5(%arg0: i32, %arg1: i32) -> (i32, i32) {
    %c0_i32 = arith.constant 0 : i32
    %c0_i32_0 = arith.constant 0 : i32
    return %c0_i32, %arg0 : i32, i32
  }
  func.func @transform_6(%arg0: i32, %arg1: i32) -> (i32, i32) {
    %c0_i32 = arith.constant 0 : i32
    return %arg1, %arg0 : i32, i32
  }
  func.func @transform_7(%arg0: i32, %arg1: i32) -> (i32, i32) {
    %c0_i32 = arith.constant 0 : i32
    return %arg1, %arg0 : i32, i32
  }
}

</mosaic_0001>

<llo_original>
// kernel: tpu_custom_call.1
$region0: #{tpu_custom_call.1}
  #allocation0 [shape = 'u32[]', space=smem, size = 0x4, offset = 0x4, fixed_abs, tag = 'smem constant byte address 0x4 - core index']
  #allocation1 [shape = 'u32[144,128]{1,0:T(1,128)}', space=vmem, size = 0x12000, scoped, tag = 'internal scratch']
  #allocation2 [shape = 'f32[1,1]{1,0:T(1,128)S(6)}', space=smem, size = 0x200, scoped, tag = 'scoped memory for tpu_custom_call.1']
  %s0 = inlined_call_operand.<no memory space> [shape: f32[1,1], index: 0, kind: input, shape index: {}]
  %s1 = inlined_call_operand.hbm [shape: f32[8,32], index: 1, kind: input, shape index: {}]
  %s2 = inlined_call_operand.hbm [shape: f32[32,128], index: 2, kind: input, shape index: {}]
  %s3 = inlined_call_operand.hbm [shape: f32[32,128], index: 3, kind: input, shape index: {}]
  %s4 = inlined_call_operand.vmem [shape: f32[1,128], index: 4, kind: input, shape index: {}]
  %s5 = inlined_call_operand.vmem [shape: f32[1,128], index: 5, kind: input, shape index: {}]
  %s6 = inlined_call_operand.hbm [shape: f32[8,128], index: 6, kind: output, shape index: {0}]
  %s7 = inlined_call_operand.hbm [shape: f32[8,128], index: 7, kind: output, shape index: {1}]
  %8 = xla_tuple %s6, %s7
  %s9 = sld [smem:[#allocation0]]
  $region54: #{tpu_custom_call.1} parent=0
    _
  %s11 = ssub.s32 1, %s9
  %s12 = scalar_select 0, %s11, %s9
  %13 = sst [smem:[#allocation2]] %s0
  $region1: #{tpu_custom_call.1} parent=0
    #allocation3 [shape = 'u8[4096]{0}', space=vmem, size = 0x1000, scoped, tag = 'input window, operand 1, single buffered']
    #allocation4 [shape = 's32[1]{0}', space=sflag, size = 0x4, scoped, tag = 'scoped memory for tpu_custom_call.1']
    #allocation5 [shape = 's32[1]{0}', space=sflag, size = 0x4, scoped, tag = 'scoped memory for tpu_custom_call.1']
    #allocation6 [shape = 'u8[16384]{0}', space=vmem, size = 0x4000, scoped, tag = 'input window, operand 2, single buffered']
    #allocation7 [shape = 's32[1]{0}', space=sflag, size = 0x4, scoped, tag = 'scoped memory for tpu_custom_call.1']
    #allocation8 [shape = 'u8[16384]{0}', space=vmem, size = 0x4000, scoped, tag = 'input window, operand 3, single buffered']
    #allocation9 [shape = 'u8[4096]{0}', space=vmem, size = 0x1000, scoped, tag = 'output window, operand 0, single buffered']
    #allocation10 [shape = 'u8[4096]{0}', space=vmem, size = 0x1000, scoped, tag = 'output window, operand 1, single buffered']
    #allocation11 [shape = 's32[1]{0}', space=sflag, size = 0x4, scoped, tag = 'scoped memory for tpu_custom_call.1']
    %14 = vsyncpa [#allocation4], 0
    %15 = vsyncpa [#allocation7], 0
    %16 = vsyncpa [#allocation5], 0
    %17 = vsyncpa [#allocation11], 0
    // Predicated region
    $region2: #{tpu_custom_call.1} parent=1 // pred_check
      _
    $region3: #{tpu_custom_call.1} parent=1 // pred_check_branch
      %19 = sbr.rel (0) target = $region5
    $region4: #{tpu_custom_call.1} parent=1 // pred_region
      _
    $region5: #{tpu_custom_call.1} parent=1 // pred_fallthru
      _
    // Predicated region
    $region6: #{tpu_custom_call.1} parent=1 // pred_check
      _
    $region7: #{tpu_custom_call.1} parent=1 // pred_check_branch
      %21 = sbr.rel (0) target = $region9
    $region8: #{tpu_custom_call.1} parent=1 // pred_region
      %s23 = ssub.s32 128, 128
      %24 = vsyncadd [#allocation4], %s23
      %s26 = sshll.u32 [#allocation3], 4
      %s27 = int_to_ptr.vmem [resolvable:$true] %s26
      %29 = dma.hbm_to_vmem [thread:$0]  %s1, 128, %s27, [#allocation4]
    $region9: #{tpu_custom_call.1} parent=1 // pred_fallthru
      _
    // Predicated region
    $region10: #{tpu_custom_call.1} parent=1 // pred_check
      _
    $region11: #{tpu_custom_call.1} parent=1 // pred_check_branch
      %31 = sbr.rel (0) target = $region13
    $region12: #{tpu_custom_call.1} parent=1 // pred_region
      %s33 = ssub.s32 512, 512
      %34 = vsyncadd [#allocation7], %s33
      %s35 = sshll.u32 [#allocation6], 4
      %s36 = int_to_ptr.vmem [resolvable:$true] %s35
      %41 = dma.hbm_to_vmem [thread:$0]  %s2, 512, %s36, [#allocation7], 128, 128, 8
    $region13: #{tpu_custom_call.1} parent=1 // pred_fallthru
      _
    // Predicated region
    $region14: #{tpu_custom_call.1} parent=1 // pred_check
      _
    $region15: #{tpu_custom_call.1} parent=1 // pred_check_branch
      %43 = sbr.rel (0) target = $region17
    $region16: #{tpu_custom_call.1} parent=1 // pred_region
      %s45 = ssub.s32 512, 512
      %46 = vsyncadd [#allocation7], %s45
      %s47 = sshll.u32 [#allocation8], 4
      %s48 = int_to_ptr.vmem [resolvable:$true] %s47
      %53 = dma.hbm_to_vmem [thread:$0]  %s3, 512, %s48, [#allocation7], 128, 128, 8
    $region17: #{tpu_custom_call.1} parent=1 // pred_fallthru
      _
    // Predicated region
    $region18: #{tpu_custom_call.1} parent=1 // pred_check
      _
    $region19: #{tpu_custom_call.1} parent=1 // pred_check_branch
      %55 = sbr.rel (0) target = $region21
    $region20: #{tpu_custom_call.1} parent=1 // pred_region
      _
    $region21: #{tpu_custom_call.1} parent=1 // pred_fallthru
      _
    // Predicated region
    $region22: #{tpu_custom_call.1} parent=1 // pred_check
      _
    $region23: #{tpu_custom_call.1} parent=1 // pred_check_branch
      %57 = sbr.rel (0) target = $region25
    $region24: #{tpu_custom_call.1} parent=1 // pred_region
      _
    $region25: #{tpu_custom_call.1} parent=1 // pred_fallthru
      _
    // Predicated region
    $region26: #{tpu_custom_call.1} parent=1 // pred_check
      _
    $region27: #{tpu_custom_call.1} parent=1 // pred_check_branch
      %59 = sbr.rel (0) target = $region29
    $region28: #{tpu_custom_call.1} parent=1 // pred_region
      %60 = dma.done [#allocation4], 128
    $region29: #{tpu_custom_call.1} parent=1 // pred_fallthru
      _
    // Predicated region
    $region30: #{tpu_custom_call.1} parent=1 // pred_check
      _
    $region31: #{tpu_custom_call.1} parent=1 // pred_check_branch
      %62 = sbr.rel (0) target = $region33
    $region32: #{tpu_custom_call.1} parent=1 // pred_region
      %63 = dma.done [#allocation7], 512
    $region33: #{tpu_custom_call.1} parent=1 // pred_fallthru
      _
    // Predicated region
    $region34: #{tpu_custom_call.1} parent=1 // pred_check
      _
    $region35: #{tpu_custom_call.1} parent=1 // pred_check_branch
      %65 = sbr.rel (0) target = $region37
    $region36: #{tpu_custom_call.1} parent=1 // pred_region
      %66 = dma.done [#allocation7], 512
    $region37: #{tpu_custom_call.1} parent=1 // pred_fallthru
      _
    %s67 = sld [smem:[#allocation2]]
    %v68 = vld [vmem:[#allocation3] sm:$0xff]
    %v69 = vld [vmem:[#allocation6] sm:$0xff]
    %v70 = vld [vmem:[#allocation6 + $0x8] sm:$0xff]
    %v71 = vld [vmem:[#allocation6 + $0x10] sm:$0xff]
    %v72 = vld [vmem:[#allocation6 + $0x18] sm:$0xff]
    %v73 = vld [vmem:[%s4] sm:$0x1]
    %v75 = vlaneseq
    %v76 = vshrl.u32 %v75, 7
    %v77 = vsub.s32 0, %v76
    %v78 = vrot.slane %v73, %v77
    %vm80 = vcmask 261120
    %v82 = vsel %vm80, %v68, 0
    %84 = vmatprep.subr.mxu0 0.0
    %85 = vmatpush1.msra.mxu0 %v69
    %86 = vmatprep.subr.mxu0 0.0
    %87 = vmatpush1.msra.mxu0 %v70
    %88 = vmatprep.subr.mxu0 0.0
    %89 = vmatpush1.msra.mxu0 %v71
    %90 = vmatprep.subr.mxu0 0.0
    %91 = vmatpush1.msra.mxu0 %v72
    %92 = vmatprep.subr.mxu0 0.0
    %93 = vmatpush1.msra.mxu0 0.0
    %94 = vmatprep.subr.mxu0 0.0
    %95 = vmatpush1.msra.mxu0 0.0
    %96 = vmatprep.subr.mxu0 0.0
    %97 = vmatpush1.msra.mxu0 0.0
    %98 = vmatprep.subr.mxu0 0.0
    %99 = vmatpush1.msra.mxu0 0.0
    %100 = vmatprep.subr.mxu0 0.0
    %101 = vmatpush1.msra.mxu0 0.0
    %102 = vmatprep.subr.mxu0 0.0
    %103 = vmatpush1.msra.mxu0 0.0
    %104 = vmatprep.subr.mxu0 0.0
    %105 = vmatpush1.msra.mxu0 0.0
    %106 = vmatprep.subr.mxu0 0.0
    %107 = vmatpush1.msra.mxu0 0.0
    %108 = vmatprep.subr.mxu0 0.0
    %109 = vmatpush1.msra.mxu0 0.0
    %110 = vmatprep.subr.mxu0 0.0
    %111 = vmatpush1.msra.mxu0 0.0
    %112 = vmatprep.subr.mxu0 0.0
    %113 = vmatpush1.msra.mxu0 0.0
    %114 = vmatprep.subr.mxu0 0.0
    %115 = vmatpush1.msra.mxu0 0.0
    %116 = vmatprep.subr.mxu0 0.0
    %117 = vmatpush1.msra.mxu0 0.0
    %118 = vmatprep.subr.mxu0 0.0
    %119 = vmatpush1.msra.mxu0 0.0
    %120 = vmatprep.subr.mxu0 0.0
    %121 = vmatpush1.msra.mxu0 0.0
    %122 = vmatprep.subr.mxu0 0.0
    %123 = vmatpush1.msra.mxu0 0.0
    %124 = vmatprep.subr.mxu0 0.0
    %125 = vmatpush1.msra.mxu0 0.0
    %126 = vmatprep.subr.mxu0 0.0
    %127 = vmatpush1.msra.mxu0 0.0
    %128 = vmatprep.subr.mxu0 0.0
    %129 = vmatpush1.msra.mxu0 0.0
    %130 = vmatprep.subr.mxu0 0.0
    %131 = vmatpush1.msra.mxu0 0.0
    %132 = vmatprep.subr.mxu0 0.0
    %133 = vmatpush1.msra.mxu0 0.0
    %134 = vmatprep.subr.mxu0 0.0
    %135 = vmatpush1.msra.mxu0 0.0
    %136 = vmatprep.subr.mxu0 0.0
    %137 = vmatpush1.msra.mxu0 0.0
    %138 = vmatprep.subr.mxu0 0.0
    %139 = vmatpush1.msra.mxu0 0.0
    %140 = vmatprep.subr.mxu0 0.0
    %141 = vmatpush1.msra.mxu0 0.0
    %142 = vmatprep.subr.mxu0 0.0
    %143 = vmatpush1.msra.mxu0 0.0
    %144 = vmatprep.subr.mxu0 0.0
    %145 = vmatpush1.msra.mxu0 0.0
    %146 = vmatprep.subr.mxu0 0.0
    %147 = vmatpush1.msra.mxu0 0.0
    %148 = vmatprep.mubr.f32.mxu0 0.0
    %149 = vmatmul.mubr.f32.gmra.mrb[0].mxu0 %v82
    %v150 = vpop.f32.mrb[0].mxu0
    %v151 = vadd.f32 %v78, %v150
    %v152 = vpop.f32.mrb[0].mxu0
    %153 = vdwg.mxu0
    %v154 = vld [vmem:[#allocation8] sm:$0xff]
    %v155 = vld [vmem:[#allocation8 + $0x8] sm:$0xff]
    %v156 = vld [vmem:[#allocation8 + $0x10] sm:$0xff]
    %v157 = vld [vmem:[#allocation8 + $0x18] sm:$0xff]
    %v158 = vld [vmem:[%s5] sm:$0x1]
    %v160 = vlaneseq
    %v161 = vshrl.u32 %v160, 7
    %v162 = vsub.s32 0, %v161
    %v163 = vrot.slane %v158, %v162
    %165 = vmatprep.subr.mxu0 0.0
    %166 = vmatpush1.msra.mxu0 %v154
    %167 = vmatprep.subr.mxu0 0.0
    %168 = vmatpush1.msra.mxu0 %v155
    %169 = vmatprep.subr.mxu0 0.0
    %170 = vmatpush1.msra.mxu0 %v156
    %171 = vmatprep.subr.mxu0 0.0
    %172 = vmatpush1.msra.mxu0 %v157
    %173 = vmatprep.subr.mxu0 0.0
    %174 = vmatpush1.msra.mxu0 0.0
    %175 = vmatprep.subr.mxu0 0.0
    %176 = vmatpush1.msra.mxu0 0.0
    %177 = vmatprep.subr.mxu0 0.0
    %178 = vmatpush1.msra.mxu0 0.0
    %179 = vmatprep.subr.mxu0 0.0
    %180 = vmatpush1.msra.mxu0 0.0
    %181 = vmatprep.subr.mxu0 0.0
    %182 = vmatpush1.msra.mxu0 0.0
    %183 = vmatprep.subr.mxu0 0.0
    %184 = vmatpush1.msra.mxu0 0.0
    %185 = vmatprep.subr.mxu0 0.0
    %186 = vmatpush1.msra.mxu0 0.0
    %187 = vmatprep.subr.mxu0 0.0
    %188 = vmatpush1.msra.mxu0 0.0
    %189 = vmatprep.subr.mxu0 0.0
    %190 = vmatpush1.msra.mxu0 0.0
    %191 = vmatprep.subr.mxu0 0.0
    %192 = vmatpush1.msra.mxu0 0.0
    %193 = vmatprep.subr.mxu0 0.0
    %194 = vmatpush1.msra.mxu0 0.0
    %195 = vmatprep.subr.mxu0 0.0
    %196 = vmatpush1.msra.mxu0 0.0
    %197 = vmatprep.subr.mxu0 0.0
    %198 = vmatpush1.msra.mxu0 0.0
    %199 = vmatprep.subr.mxu0 0.0
    %200 = vmatpush1.msra.mxu0 0.0
    %201 = vmatprep.subr.mxu0 0.0
    %202 = vmatpush1.msra.mxu0 0.0
    %203 = vmatprep.subr.mxu0 0.0
    %204 = vmatpush1.msra.mxu0 0.0
    %205 = vmatprep.subr.mxu0 0.0
    %206 = vmatpush1.msra.mxu0 0.0
    %207 = vmatprep.subr.mxu0 0.0
    %208 = vmatpush1.msra.mxu0 0.0
    %209 = vmatprep.subr.mxu0 0.0
    %210 = vmatpush1.msra.mxu0 0.0
    %211 = vmatprep.subr.mxu0 0.0
    %212 = vmatpush1.msra.mxu0 0.0
    %213 = vmatprep.subr.mxu0 0.0
    %214 = vmatpush1.msra.mxu0 0.0
    %215 = vmatprep.subr.mxu0 0.0
    %216 = vmatpush1.msra.mxu0 0.0
    %217 = vmatprep.subr.mxu0 0.0
    %218 = vmatpush1.msra.mxu0 0.0
    %219 = vmatprep.subr.mxu0 0.0
    %220 = vmatpush1.msra.mxu0 0.0
    %221 = vmatprep.subr.mxu0 0.0
    %222 = vmatpush1.msra.mxu0 0.0
    %223 = vmatprep.subr.mxu0 0.0
    %224 = vmatpush1.msra.mxu0 0.0
    %225 = vmatprep.subr.mxu0 0.0
    %226 = vmatpush1.msra.mxu0 0.0
    %227 = vmatprep.subr.mxu0 0.0
    %228 = vmatpush1.msra.mxu0 0.0
    %229 = vmatprep.mubr.f32.mxu0 0.0
    %230 = vmatmul.mubr.f32.gmra.mrb[0].mxu0 %v82
    %v231 = vpop.f32.mrb[0].mxu0
    %v232 = vadd.f32 %v163, %v231
    %v233 = vpop.f32.mrb[0].mxu0
    %234 = vdwg.mxu0
    %v235 = vstv %s67
    %vm236 = vcmp.gt.f32.partialorder %v232, %v235
    %v237 = vsel %vm236, 1, 0
    %v238 = vcvt.s32.f32 %v237
    %v239 = vrcp.pop %v232
    %v240 = vmul.f32 %v151, %v239
    %v241 = vmul.f32 %v238, %v240
    %242 = vst [vmem:[#allocation9] sm:$0xff] %v241
    %243 = vst [vmem:[#allocation10] sm:$0xff] %v232
    // Predicated region
    $region38: #{tpu_custom_call.1} parent=1 // pred_check
      _
    $region39: #{tpu_custom_call.1} parent=1 // pred_check_branch
      %245 = sbr.rel (0) target = $region41
    $region40: #{tpu_custom_call.1} parent=1 // pred_region
      %s247 = ssub.s32 128, 128
      %248 = vsyncadd [#allocation5], %s247
      %s250 = sshll.u32 [#allocation9], 4
      %s251 = int_to_ptr.vmem [resolvable:$true] %s250
      %253 = dma.vmem_to_hbm [thread:$0]  %s251, 128, %s6, [#allocation5]
    $region41: #{tpu_custom_call.1} parent=1 // pred_fallthru
      _
    // Predicated region
    $region42: #{tpu_custom_call.1} parent=1 // pred_check
      _
    $region43: #{tpu_custom_call.1} parent=1 // pred_check_branch
      %255 = sbr.rel (0) target = $region45
    $region44: #{tpu_custom_call.1} parent=1 // pred_region
      %s257 = ssub.s32 128, 128
      %258 = vsyncadd [#allocation11], %s257
      %s260 = sshll.u32 [#allocation10], 4
      %s261 = int_to_ptr.vmem [resolvable:$true] %s260
      %263 = dma.vmem_to_hbm [thread:$0]  %s261, 128, %s7, [#allocation11]
    $region45: #{tpu_custom_call.1} parent=1 // pred_fallthru
      _
    // Predicated region
    $region46: #{tpu_custom_call.1} parent=1 // pred_check
      _
    $region47: #{tpu_custom_call.1} parent=1 // pred_check_branch
      %265 = sbr.rel (0) target = $region49
    $region48: #{tpu_custom_call.1} parent=1 // pred_region
      %266 = dma.done [#allocation5], 128
    $region49: #{tpu_custom_call.1} parent=1 // pred_fallthru
      _
    // Predicated region
    $region50: #{tpu_custom_call.1} parent=1 // pred_check
      _
    $region51: #{tpu_custom_call.1} parent=1 // pred_check_branch
      %268 = sbr.rel (0) target = $region53
    $region52: #{tpu_custom_call.1} parent=1 // pred_region
      %269 = dma.done [#allocation11], 128
    $region53: #{tpu_custom_call.1} parent=1 // pred_fallthru
      _
    %270 = vsyncpa [#allocation4], 1
    %271 = vsyncpa [#allocation7], 1
    %272 = vsyncpa [#allocation5], 1
    %273 = vsyncpa [#allocation11], 1

</llo_original>
